<compile_context>
chip_gen: v6e
topology: v6e:2x2x1
jax: 0.10.0
libtpu: 0.0.40
codegen_flags: <defaults>
</compile_context>

<pallas_src>
import jax
import jax.numpy as jnp
from jax.experimental import pallas as pl
from jax.experimental.pallas import tpu as pltpu


def _attention_kernel(x_ref, mask_ref, Wt_ref, wbv_ref, z_ref, a_ref):
    # x_ref:    (Bb, T, H)   chunk of batch elements (T padded to a multiple of 8)
    # mask_ref: (Bb, 1, T)   float mask, lane-dense (T on lanes)
    # Wt_ref:   (H, H)       W.weight PRE-TRANSPOSED (in_features, out_features)
    # wbv_ref:  (2, H)       row 0 = W.bias, row 1 = v.weight
    # z_ref:    (Bb, T, H)
    # a_ref:    (Bb, 1, T)   lane-dense attention weights
    Bb, T, H = x_ref.shape
    x = x_ref[...]                                     # (Bb, T, H)
    x2 = x.reshape(Bb * T, H)                          # free: T % 8 == 0 (padded)

    wbv = wbv_ref[...]                                 # (2, H)
    wb = wbv[0:1, :]                                   # (1, H)  W.bias
    vr = wbv[1:2, :]                                   # (1, H)  v.weight row

    # h = tanh(x @ W^T + b) -- weight already transposed in the wrapper (MXU matmul).
    h2 = jnp.tanh(
        jnp.dot(x2, Wt_ref[...], preferred_element_type=jnp.float32) + wb
    )                                                  # (Bb*T, H) f32

    # v-projection: VPU multiply + lane reduction on the 2-D view (no 3-D temporary,
    # no N=1 MXU matmul).  v.bias is omitted: it cancels in the normalization below.
    u2 = jnp.sum(h2 * vr, axis=-1, keepdims=True)      # (Bb*T, 1)

    # Move the scores to a lane-dense layout (T on lanes) to match mask / a.
    u = jnp.transpose(u2.reshape(Bb, T, 1), (0, 2, 1))  # (Bb, 1, T), small XLU relayout

    mask = mask_ref[...]                               # (Bb, 1, T)
    neg_big = jnp.float32(-1e30)
    u_m = jnp.where(mask > 0, u, neg_big)              # masked max-stabilization
    m = jnp.max(u_m, axis=-1, keepdims=True)           # (Bb, 1, 1)
    e = jnp.exp(u_m - m) * mask                        # (Bb, 1, T)
    s = jnp.sum(e, axis=-1, keepdims=True)             # (Bb, 1, 1)
    a = e * pl.reciprocal(s, approx=False)             # (Bb, 1, T)

    a_ref[...] = a.astype(a_ref.dtype)                 # lane-dense store

    a3 = jnp.transpose(a, (0, 2, 1))                   # (Bb, T, 1), small XLU relayout
    z_ref[...] = (x * a3).astype(z_ref.dtype)          # broadcast over H lanes


def _ceil_div(a, b):
    return -(-a // b)


def _vmem_capacity_bytes():
    try:
        info = pltpu.get_tpu_info()
        cap = getattr(info, "vmem_capacity_bytes", None)
        if cap:
            return int(cap)
    except Exception:
        pass
    return 64 << 20  # conservative fallback: v7x per-TensorCore VMEM


def _pick_tiling(B, T, H, itemsize, vmem_cap):
    """Choose T padding, batch block Bb, padded batch, grid steps, vmem limit."""
    Tpad = _ceil_div(T, 8) * 8
    per_b = max(Tpad * H * itemsize, 1)          # bytes of one batch element of x (or z)
    wt_bytes = H * H * 4
    wbv_bytes = 2 * H * 4

    # Per-step footprint ~= x(2-buf) + z(2-buf) + f32 temporaries (~2 blocks) = 6 blocks.
    usable = (vmem_cap * 3) // 4 - wt_bytes - wbv_bytes - (1 << 20)
    x_budget = max(256 * 1024, min(8 << 20, max(usable, 0) // 6))

    Bb = max(1, min(B, x_budget // per_b))
    # Guarantee >= 2 grid steps when possible: v7x has 2 TensorCores on the
    # (only) parallel axis, and a 1-step grid also gets zero DMA/compute overlap.
    while Bb > 1 and _ceil_div(B, Bb) < 2:
        Bb = _ceil_div(Bb, 2)

    nsteps = _ceil_div(B, Bb)
    Bpad = nsteps * Bb

    vmem_limit = wt_bytes + wbv_bytes + 6 * Bb * per_b + (4 << 20)
    vmem_limit = max(vmem_limit, 16 << 20)
    vmem_limit = min(vmem_limit, (vmem_cap * 85) // 100)
    return Tpad, Bb, Bpad, nsteps, int(vmem_limit)


def attention_forward(inputs, mask, W_weight, W_bias, v_weight, v_bias):
    """inputs: (B, T, H), mask: (B, T) (any numeric/bool dtype). Returns (z, a)."""
    B, T, H = inputs.shape
    dtype = inputs.dtype
    itemsize = jnp.dtype(dtype).itemsize

    vmem_cap = _vmem_capacity_bytes()
    Tpad, Bb, Bpad, nsteps, vmem_limit = _pick_tiling(B, T, H, itemsize, vmem_cap)

    # Pad batch (extra rows discarded) and T (padded positions masked to 0 -> exact).
    x_p = jnp.pad(inputs, ((0, Bpad - B), (0, Tpad - T), (0, 0)))
    mask_f = mask.astype(jnp.float32)
    mask_p = jnp.pad(
        mask_f, ((0, Bpad - B), (0, Tpad - T)),
        constant_values=((0.0, 1.0), (0.0, 0.0)),  # pad batch rows valid, pad T masked
    ).reshape(Bpad, 1, Tpad)

    Wt = jnp.transpose(W_weight).astype(jnp.float32)        # (H_in, H_out), one-time
    wbv = jnp.stack(
        [W_bias.reshape(H).astype(jnp.float32),
         v_weight.reshape(H).astype(jnp.float32)], axis=0)  # (2, H)
    del v_bias  # constant logit shift: cancels exactly in the normalization

    flops = 2 * Bpad * Tpad * H * H + 8 * Bpad * Tpad * H
    transcendentals = Bpad * Tpad * (H + 1)                 # tanh + exp
    bytes_accessed = 4 * (2 * Bpad * Tpad * H + 2 * Bpad * Tpad + H * H + 2 * H)

    z_p, a_p = pl.pallas_call(
        _attention_kernel,
        out_shape=(
            jax.ShapeDtypeStruct((Bpad, Tpad, H), dtype),
            jax.ShapeDtypeStruct((Bpad, 1, Tpad), jnp.float32),
        ),
        grid_spec=pltpu.PrefetchScalarGridSpec(
            num_scalar_prefetch=0,
            grid=(nsteps,),
            in_specs=[
                pl.BlockSpec((Bb, Tpad, H), lambda b: (b, 0, 0)),   # inputs chunk
                pl.BlockSpec((Bb, 1, Tpad), lambda b: (b, 0, 0)),   # mask chunk (lane-dense)
                pl.BlockSpec((H, H), lambda b: (0, 0)),             # W.weight^T (resident)
                pl.BlockSpec((2, H), lambda b: (0, 0)),             # [W.bias; v.weight]
            ],
            out_specs=[
                pl.BlockSpec((Bb, Tpad, H), lambda b: (b, 0, 0)),   # z
                pl.BlockSpec((Bb, 1, Tpad), lambda b: (b, 0, 0)),   # a (lane-dense)
            ],
        ),
        compiler_params=pltpu.CompilerParams(
            dimension_semantics=("parallel",),                      # batch chunks independent
            vmem_limit_bytes=vmem_limit,
        ),
        cost_estimate=pl.CostEstimate(
            flops=flops,
            transcendentals=transcendentals,
            bytes_accessed=bytes_accessed,
        ),
    )(x_p, mask_p, Wt, wbv)

    z = z_p[:B, :T, :]
    a = a_p[:B, 0, :T]
    return z, a


def _reference(inputs, mask, W_weight, W_bias, v_weight, v_bias):
    # Pure-JAX reference mirroring the PyTorch forward exactly.
    h = jnp.tanh(inputs @ W_weight.T + W_bias)
    u = h @ v_weight.T + v_bias                      # (B, T, 1)
    u = jnp.exp(u)
    u = mask.astype(jnp.float32)[..., None] * u
    sums = jnp.sum(u, axis=1, keepdims=True)
    a = u / sums
    z = inputs * a
    return z, a.reshape(inputs.shape[0], inputs.shape[1])


if __name__ == "__main__":
    B, T, H = 2, 8, 32   # batch, seq, hidden_size

    key = jax.random.PRNGKey(0)
    k_x, k_w, k_wb, k_v, k_vb = jax.random.split(key, 5)

    inputs = jax.random.normal(k_x, (B, T, H), dtype=jnp.float32)
    # mask: first batch fully valid, second batch has last 3 positions masked
    mask = jnp.array(
        [[1] * T,
         [1] * (T - 3) + [0] * 3],
        dtype=jnp.float32,
    )

    # Parameter shapes follow nn.Linear(H, H) and nn.Linear(H, 1)
    W_weight = jax.random.normal(k_w, (H, H), dtype=jnp.float32) * 0.1
    W_bias = jax.random.normal(k_wb, (H,), dtype=jnp.float32) * 0.1
    v_weight = jax.random.normal(k_v, (1, H), dtype=jnp.float32) * 0.1
    v_bias = jax.random.normal(k_vb, (1,), dtype=jnp.float32) * 0.1

    z, a = attention_forward(inputs, mask, W_weight, W_bias, v_weight, v_bias)
    jax.block_until_ready((z, a))

    z_exp, a_exp = _reference(inputs, mask, W_weight, W_bias, v_weight, v_bias)
    assert jnp.allclose(z, z_exp, atol=1e-5, rtol=1e-5), "z mismatch"
    assert jnp.allclose(a, a_exp, atol=1e-5, rtol=1e-5), "a mismatch"

    print("KERNEL_OK")
</pallas_src>

<mosaic_0001>
module attributes {stable_mosaic.version = 11 : i64} {
  func.func @_attention_kernel(%arg0: i32, %arg1: memref<1x8x32xf32, #tpu.memory_space<vmem>>, %arg2: memref<1x1x8xf32, #tpu.memory_space<vmem>>, %arg3: memref<32x32xf32, #tpu.memory_space<vmem>>, %arg4: memref<2x32xf32, #tpu.memory_space<vmem>>, %arg5: memref<1x8x32xf32, #tpu.memory_space<vmem>>, %arg6: memref<1x1x8xf32, #tpu.memory_space<vmem>>) attributes {dimension_semantics = [#tpu.dimension_semantics<parallel>], iteration_bounds = array<i64: 2>, scalar_prefetch = 0 : i64, scratch_operands = 0 : i64, tpu.core_type = #tpu.core_type<tc>, window_params = [{transform_indices = @transform_0, window_bounds = array<i64: 1, 8, 32>}, {transform_indices = @transform_1, window_bounds = array<i64: 1, 1, 8>}, {pipeline_mode = #tpu.pipeline_mode<synchronous>, transform_indices = @transform_2, window_bounds = array<i64: 32, 32>}, {pipeline_mode = #tpu.pipeline_mode<synchronous>, transform_indices = @transform_3, window_bounds = array<i64: 2, 32>}, {transform_indices = @transform_4, window_bounds = array<i64: 1, 8, 32>}, {transform_indices = @transform_5, window_bounds = array<i64: 1, 1, 8>}]} {
    %c0 = arith.constant 0 : index
    %c0_0 = arith.constant 0 : index
    %c0_1 = arith.constant 0 : index
    %0 = vector.load %arg1[%c0, %c0_0, %c0_1] : memref<1x8x32xf32, #tpu.memory_space<vmem>>, vector<1x8x32xf32>
    %1 = vector.shape_cast %0 : vector<1x8x32xf32> to vector<8x32xf32>
    %c0_2 = arith.constant 0 : index
    %c0_3 = arith.constant 0 : index
    %2 = vector.load %arg4[%c0_2, %c0_3] : memref<2x32xf32, #tpu.memory_space<vmem>>, vector<2x32xf32>
    %3 = vector.extract_strided_slice %2 {offsets = [0, 0], sizes = [1, 32], strides = [1, 1]} : vector<2x32xf32> to vector<1x32xf32>
    %4 = vector.extract_strided_slice %2 {offsets = [1, 0], sizes = [1, 32], strides = [1, 1]} : vector<2x32xf32> to vector<1x32xf32>
    %c0_4 = arith.constant 0 : index
    %c0_5 = arith.constant 0 : index
    %5 = vector.load %arg3[%c0_4, %c0_5] : memref<32x32xf32, #tpu.memory_space<vmem>>, vector<32x32xf32>
    %cst = arith.constant dense<0.000000e+00> : vector<8x32xf32>
    %6 = tpu.matmul %1, %5, %cst {dimension_numbers = #tpu.dot_dimension_numbers<[1], [0], [0], [1], [0, 0, 1, 1], [], []>} : vector<8x32xf32>, vector<32x32xf32>, vector<8x32xf32> -> vector<8x32xf32>
    %7 = vector.broadcast %3 : vector<1x32xf32> to vector<8x32xf32>
    %8 = arith.addf %6, %7 : vector<8x32xf32>
    %9 = math.tanh %8 : vector<8x32xf32>
    %10 = vector.broadcast %4 : vector<1x32xf32> to vector<8x32xf32>
    %11 = arith.mulf %9, %10 : vector<8x32xf32>
    %cst_6 = arith.constant dense<0.000000e+00> : vector<8xf32>
    %12 = vector.multi_reduction <add>, %11, %cst_6 [1] : vector<8x32xf32> to vector<8xf32>
    %13 = vector.shape_cast %12 : vector<8xf32> to vector<8x1xf32>
    %14 = vector.shape_cast %13 : vector<8x1xf32> to vector<1x8x1xf32>
    %15 = tpu.transpose %14, [0, 2, 1] : vector<1x8x1xf32> -> vector<1x1x8xf32>
    %c0_7 = arith.constant 0 : index
    %c0_8 = arith.constant 0 : index
    %c0_9 = arith.constant 0 : index
    %16 = vector.load %arg2[%c0_7, %c0_8, %c0_9] : memref<1x1x8xf32, #tpu.memory_space<vmem>>, vector<1x1x8xf32>
    %cst_10 = arith.constant 0.000000e+00 : f32
    %17 = vector.broadcast %cst_10 : f32 to vector<1x1x8xf32>
    %18 = arith.cmpf ogt, %16, %17 : vector<1x1x8xf32>
    %cst_11 = arith.constant -1.000000e+30 : f32
    %19 = vector.broadcast %cst_11 : f32 to vector<1x1x8xf32>
    %20 = arith.select %18, %15, %19 : vector<1x1x8xi1>, vector<1x1x8xf32>
    %cst_12 = arith.constant dense<0xFF800000> : vector<1x1xf32>
    %21 = vector.multi_reduction <maximumf>, %20, %cst_12 [2] : vector<1x1x8xf32> to vector<1x1xf32>
    %22 = vector.shape_cast %21 : vector<1x1xf32> to vector<1x1x1xf32>
    %23 = vector.broadcast %22 : vector<1x1x1xf32> to vector<1x1x8xf32>
    %24 = arith.subf %20, %23 : vector<1x1x8xf32>
    %25 = math.exp %24 : vector<1x1x8xf32>
    %26 = arith.mulf %25, %16 : vector<1x1x8xf32>
    %cst_13 = arith.constant dense<0.000000e+00> : vector<1x1xf32>
    %27 = vector.multi_reduction <add>, %26, %cst_13 [2] : vector<1x1x8xf32> to vector<1x1xf32>
    %28 = vector.shape_cast %27 : vector<1x1xf32> to vector<1x1x1xf32>
    %29 = tpu.reciprocal %28 : vector<1x1x1xf32> -> vector<1x1x1xf32>
    %30 = vector.broadcast %29 : vector<1x1x1xf32> to vector<1x1x8xf32>
    %31 = arith.mulf %26, %30 : vector<1x1x8xf32>
    %c0_14 = arith.constant 0 : index
    %c0_15 = arith.constant 0 : index
    %c0_16 = arith.constant 0 : index
    %32 = vector.load %arg6[%c0_14, %c0_15, %c0_16] : memref<1x1x8xf32, #tpu.memory_space<vmem>>, vector<1x1x8xf32>
    tpu.vector_store %arg6[%c0_14, %c0_15, %c0_16], %31 {strides = array<i32>} : memref<1x1x8xf32, #tpu.memory_space<vmem>>, vector<1x1x8xf32>,
    %33 = tpu.transpose %31, [0, 2, 1] : vector<1x1x8xf32> -> vector<1x8x1xf32>
    %34 = vector.broadcast %33 : vector<1x8x1xf32> to vector<1x8x32xf32>
    %35 = arith.mulf %0, %34 : vector<1x8x32xf32>
    %c0_17 = arith.constant 0 : index
    %c0_18 = arith.constant 0 : index
    %c0_19 = arith.constant 0 : index
    %36 = vector.load %arg5[%c0_17, %c0_18, %c0_19] : memref<1x8x32xf32, #tpu.memory_space<vmem>>, vector<1x8x32xf32>
    tpu.vector_store %arg5[%c0_17, %c0_18, %c0_19], %35 {strides = array<i32>} : memref<1x8x32xf32, #tpu.memory_space<vmem>>, vector<1x8x32xf32>,
    return
  }
  func.func @transform_0(%arg0: i32) -> (i32, i32, i32) {
    %c0_i32 = arith.constant 0 : i32
    %c0_i32_0 = arith.constant 0 : i32
    %c0_i32_1 = arith.constant 0 : i32
    return %arg0, %c0_i32, %c0_i32_0 : i32, i32, i32
  }
  func.func @transform_1(%arg0: i32) -> (i32, i32, i32) {
    %c0_i32 = arith.constant 0 : i32
    %c0_i32_0 = arith.constant 0 : i32
    %c0_i32_1 = arith.constant 0 : i32
    return %arg0, %c0_i32, %c0_i32_0 : i32, i32, i32
  }
  func.func @transform_2(%arg0: i32) -> (i32, i32) {
    %c0_i32 = arith.constant 0 : i32
    %c0_i32_0 = arith.constant 0 : i32
    %c0_i32_1 = arith.constant 0 : i32
    return %c0_i32, %c0_i32_0 : i32, i32
  }
  func.func @transform_3(%arg0: i32) -> (i32, i32) {
    %c0_i32 = arith.constant 0 : i32
    %c0_i32_0 = arith.constant 0 : i32
    %c0_i32_1 = arith.constant 0 : i32
    return %c0_i32, %c0_i32_0 : i32, i32
  }
  func.func @transform_4(%arg0: i32) -> (i32, i32, i32) {
    %c0_i32 = arith.constant 0 : i32
    %c0_i32_0 = arith.constant 0 : i32
    %c0_i32_1 = arith.constant 0 : i32
    return %arg0, %c0_i32, %c0_i32_0 : i32, i32, i32
  }
  func.func @transform_5(%arg0: i32) -> (i32, i32, i32) {
    %c0_i32 = arith.constant 0 : i32
    %c0_i32_0 = arith.constant 0 : i32
    %c0_i32_1 = arith.constant 0 : i32
    return %arg0, %c0_i32, %c0_i32_0 : i32, i32, i32
  }
}

</mosaic_0001>

<llo_original>
// kernel: tpu_custom_call.1
$region0: #{tpu_custom_call.1}
  #allocation0 [shape = 'u32[]', space=smem, size = 0x4, offset = 0x4, fixed_abs, tag = 'smem constant byte address 0x4 - core index']
  #allocation1 [shape = 'u32[144,128]{1,0:T(1,128)}', space=vmem, size = 0x12000, scoped, tag = 'internal scratch']
  %s0 = inlined_call_operand.hbm [shape: f32[2,8,32], index: 0, kind: input, shape index: {}]
  %s1 = inlined_call_operand.hbm [shape: f32[2,1,8], index: 1, kind: input, shape index: {}]
  %s2 = inlined_call_operand.hbm [shape: f32[32,32], index: 2, kind: input, shape index: {}]
  %s3 = inlined_call_operand.vmem [shape: f32[2,32], index: 3, kind: input, shape index: {}]
  %s4 = inlined_call_operand.hbm [shape: f32[2,8,32], index: 4, kind: output, shape index: {0}]
  %s5 = inlined_call_operand.hbm [shape: f32[2,1,8], index: 5, kind: output, shape index: {1}]
  %6 = xla_tuple %s4, %s5
  %s7 = sld [smem:[#allocation0]]
  $region69: #{tpu_custom_call.1} parent=0
    _
  %s9 = ssub.s32 1, %s7
  %s10 = scalar_select 0, %s9, %s7
  $region1: #{tpu_custom_call.1} parent=0
    #allocation2 [shape = 'u8[8192]{0}', space=vmem, size = 0x2000, scoped, tag = 'input window, operand 0']
    #allocation3 [shape = 's32[2]{0}', space=sflag, size = 0x8, scoped, tag = 'scoped memory for tpu_custom_call.1']
    #allocation4 [shape = 's32[2]{0}', space=sflag, size = 0x8, scoped, tag = 'scoped memory for tpu_custom_call.1']
    #allocation5 [shape = 'u8[1024]{0}', space=vmem, size = 0x400, scoped, tag = 'input window, operand 1']
    #allocation6 [shape = 's32[2]{0}', space=sflag, size = 0x8, scoped, tag = 'scoped memory for tpu_custom_call.1']
    #allocation7 [shape = 'u8[16384]{0}', space=vmem, size = 0x4000, scoped, tag = 'input window, operand 2, single buffered']
    #allocation8 [shape = 'u8[8192]{0}', space=vmem, size = 0x2000, scoped, tag = 'output window, operand 0']
    #allocation9 [shape = 'u8[1024]{0}', space=vmem, size = 0x400, scoped, tag = 'output window, operand 1']
    #allocation10 [shape = 's32[2]{0}', space=sflag, size = 0x8, scoped, tag = 'scoped memory for tpu_custom_call.1']
    %11 = vsyncpa [#allocation3], 0
    %s12 = scalar_lea.sflag [#allocation3], 1
    %13 = vsyncpa %s12, 0
    %14 = vsyncpa [#allocation6], 0
    %s15 = scalar_lea.sflag [#allocation6], 1
    %16 = vsyncpa %s15, 0
    %17 = vsyncpa [#allocation4], 0
    %s18 = scalar_lea.sflag [#allocation4], 1
    %19 = vsyncpa %s18, 0
    %20 = vsyncpa [#allocation10], 0
    %s21 = scalar_lea.sflag [#allocation10], 1
    %22 = vsyncpa %s21, 0
    loop: start=0, step=1, limit=4
    $region2: #{tpu_custom_call.1} parent=1 // loop_pre_header
      _
    $region3: #{tpu_custom_call.1} parent=1 // loop_header
      %s24 = sphi 0, %s28
      %p25 = scmp.ge.s32.totalorder %s24, 4
      %s34 = sphi 0, %s36
      %s37 = sphi 0, %s34
      %s38 = sphi 0, %s37
      %s54 = sphi 0, %s38
      %s60 = sphi 0, %s62
      %s63 = sphi 0, %s60
      %s64 = sphi 0, %s63
      %s80 = sphi 0, %s64
      %s84 = sphi 0, %s84
      %s86 = sphi 0, %s84
      %s87 = sphi 0, %s86
      %s101 = sphi 0, %s87
      %s105 = sphi 0, %s105
      %s107 = sphi 0, %s105
      %s108 = sphi 0, %s107
      %s122 = sphi 0, %s108
      %s128 = sphi 0, %s130
      %s131 = sphi 0, %s128
      %s132 = sphi 0, %s131
      %s148 = sphi 0, %s132
      %s154 = sphi 0, %s156
      %s157 = sphi 0, %s154
      %s158 = sphi 0, %s157
      %s174 = sphi 0, %s158
    $region4: #{tpu_custom_call.1} parent=1 // loop_header_branch
      %27 = sbr.rel (%p25) target = $region8
    $region5: #{tpu_custom_call.1} parent=1 // loop_body
      %s29 = ssub.s32 %s24, 1
      %s30 = ssub.s32 %s24, 2
      %s31 = sadd.s32 %s24, 1
      %s32 = ssub.s32 %s24, %s31
      %p33 = scmp.eq.s32.totalorder %s32, 0
      %s35 = sadd.s32 %s34, 1
      %s36 = scalar_select %p33, %s34, %s35
      %p39 = pneg %p33
      %p40 = scmp.eq.s32.totalorder %s24, 1
      %p41 = por %p39, %p40
      %p42 = scmp.ne.s32.totalorder %s34, %s37
      %p43 = scmp.eq.s32.totalorder %s24, 0
      %p44 = por %p42, %p43
      %p45 = scmp.ne.s32.totalorder %s34, %s37
      %p46 = scmp.eq.s32.totalorder %s29, 1
      %p47 = por %p45, %p46
      %p48 = scmp.ne.s32.totalorder %s37, %s38
      %p49 = scmp.eq.s32.totalorder %s29, 0
      %p50 = por %p48, %p49
      %p51 = scmp.ne.s32.totalorder %s37, %s38
      %p52 = scmp.eq.s32.totalorder %s30, 1
      %p53 = por %p51, %p52
      %p55 = scmp.ne.s32.totalorder %s38, %s54
      %p56 = scmp.eq.s32.totalorder %s30, 0
      %p57 = por %p55, %p56
      %s58 = ssub.s32 %s24, %s31
      %p59 = scmp.eq.s32.totalorder %s58, 0
      %s61 = sadd.s32 %s60, 1
      %s62 = scalar_select %p59, %s60, %s61
      %p65 = pneg %p59
      %p66 = scmp.eq.s32.totalorder %s24, 1
      %p67 = por %p65, %p66
      %p68 = scmp.ne.s32.totalorder %s60, %s63
      %p69 = scmp.eq.s32.totalorder %s24, 0
      %p70 = por %p68, %p69
      %p71 = scmp.ne.s32.totalorder %s60, %s63
      %p72 = scmp.eq.s32.totalorder %s29, 1
      %p73 = por %p71, %p72
      %p74 = scmp.ne.s32.totalorder %s63, %s64
      %p75 = scmp.eq.s32.totalorder %s29, 0
      %p76 = por %p74, %p75
      %p77 = scmp.ne.s32.totalorder %s63, %s64
      %p78 = scmp.eq.s32.totalorder %s30, 1
      %p79 = por %p77, %p78
      %p81 = scmp.ne.s32.totalorder %s64, %s80
      %p82 = scmp.eq.s32.totalorder %s30, 0
      %p83 = por %p81, %p82
      %s85 = sadd.s32 %s84, 1
      %p88 = scmp.eq.s32.totalorder %s24, 1
      %p89 = scmp.ne.s32.totalorder %s84, %s86
      %p90 = scmp.eq.s32.totalorder %s24, 0
      %p91 = por %p89, %p90
      %p92 = scmp.ne.s32.totalorder %s84, %s86
      %p93 = scmp.eq.s32.totalorder %s29, 1
      %p94 = por %p92, %p93
      %p95 = scmp.ne.s32.totalorder %s86, %s87
      %p96 = scmp.eq.s32.totalorder %s29, 0
      %p97 = por %p95, %p96
      %p98 = scmp.ne.s32.totalorder %s86, %s87
      %p99 = scmp.eq.s32.totalorder %s30, 1
      %p100 = por %p98, %p99
      %p102 = scmp.ne.s32.totalorder %s87, %s101
      %p103 = scmp.eq.s32.totalorder %s30, 0
      %p104 = por %p102, %p103
      %s106 = sadd.s32 %s105, 1
      %p109 = scmp.eq.s32.totalorder %s24, 1
      %p110 = scmp.ne.s32.totalorder %s105, %s107
      %p111 = scmp.eq.s32.totalorder %s24, 0
      %p112 = por %p110, %p111
      %p113 = scmp.ne.s32.totalorder %s105, %s107
      %p114 = scmp.eq.s32.totalorder %s29, 1
      %p115 = por %p113, %p114
      %p116 = scmp.ne.s32.totalorder %s107, %s108
      %p117 = scmp.eq.s32.totalorder %s29, 0
      %p118 = por %p116, %p117
      %p119 = scmp.ne.s32.totalorder %s107, %s108
      %p120 = scmp.eq.s32.totalorder %s30, 1
      %p121 = por %p119, %p120
      %p123 = scmp.ne.s32.totalorder %s108, %s122
      %p124 = scmp.eq.s32.totalorder %s30, 0
      %p125 = por %p123, %p124
      %s126 = ssub.s32 %s24, %s31
      %p127 = scmp.eq.s32.totalorder %s126, 0
      %s129 = sadd.s32 %s128, 1
      %s130 = scalar_select %p127, %s128, %s129
      %p133 = pneg %p127
      %p134 = scmp.eq.s32.totalorder %s24, 1
      %p135 = por %p133, %p134
      %p136 = scmp.ne.s32.totalorder %s128, %s131
      %p137 = scmp.eq.s32.totalorder %s24, 0
      %p138 = por %p136, %p137
      %p139 = scmp.ne.s32.totalorder %s128, %s131
      %p140 = scmp.eq.s32.totalorder %s29, 1
      %p141 = por %p139, %p140
      %p142 = scmp.ne.s32.totalorder %s131, %s132
      %p143 = scmp.eq.s32.totalorder %s29, 0
      %p144 = por %p142, %p143
      %p145 = scmp.ne.s32.totalorder %s131, %s132
      %p146 = scmp.eq.s32.totalorder %s30, 1
      %p147 = por %p145, %p146
      %p149 = scmp.ne.s32.totalorder %s132, %s148
      %p150 = scmp.eq.s32.totalorder %s30, 0
      %p151 = por %p149, %p150
      %s152 = ssub.s32 %s24, %s31
      %p153 = scmp.eq.s32.totalorder %s152, 0
      %s155 = sadd.s32 %s154, 1
      %s156 = scalar_select %p153, %s154, %s155
      %p159 = pneg %p153
      %p160 = scmp.eq.s32.totalorder %s24, 1
      %p161 = por %p159, %p160
      %p162 = scmp.ne.s32.totalorder %s154, %s157
      %p163 = scmp.eq.s32.totalorder %s24, 0
      %p164 = por %p162, %p163
      %p165 = scmp.ne.s32.totalorder %s154, %s157
      %p166 = scmp.eq.s32.totalorder %s29, 1
      %p167 = por %p165, %p166
      %p168 = scmp.ne.s32.totalorder %s157, %s158
      %p169 = scmp.eq.s32.totalorder %s29, 0
      %p170 = por %p168, %p169
      %p171 = scmp.ne.s32.totalorder %s157, %s158
      %p172 = scmp.eq.s32.totalorder %s30, 1
      %p173 = por %p171, %p172
      %p175 = scmp.ne.s32.totalorder %s158, %s174
      %p176 = scmp.eq.s32.totalorder %s30, 0
      %p177 = por %p175, %p176
      %p178 = scmp.le.s32.totalorder 1, %s24
      %p179 = scmp.lt.s32.totalorder %s24, 3
      %p180 = pnand %p178, %p179
      %p181 = pneg %p180
      // Predicated region
      $region9: #{tpu_custom_call.1} parent=5 // pred_check
        _
      $region10: #{tpu_custom_call.1} parent=5 // pred_check_branch
        %183 = sbr.rel (%p180) target = $region12
      $region11: #{tpu_custom_call.1} parent=5 // pred_region
        %s184 = ssub.s32 %s24, 1
        // Predicated region
        $region13: #{tpu_custom_call.1} parent=11 // pred_check
          %p185 = pneg %p97
        $region14: #{tpu_custom_call.1} parent=11 // pred_check_branch
          %187 = sbr.rel (%p185) target = $region16
        $region15: #{tpu_custom_call.1} parent=11 // pred_region
          %s189 = ssub.s32 512, 512
          %190 = vsyncadd [#allocation6], %s189
          %s191 = sshll.u32 [#allocation7], 4
          %s192 = int_to_ptr.vmem [resolvable:$true] %s191
          %197 = dma.hbm_to_vmem [thread:$0]  %s2, 512, %s192, [#allocation6], 128, 128, 8
        $region16: #{tpu_custom_call.1} parent=11 // pred_fallthru
          _
        // Predicated region
        $region17: #{tpu_custom_call.1} parent=11 // pred_check
          %p198 = pneg %p118
        $region18: #{tpu_custom_call.1} parent=11 // pred_check_branch
          %200 = sbr.rel (%p198) target = $region20
        $region19: #{tpu_custom_call.1} parent=11 // pred_region
          _
        $region20: #{tpu_custom_call.1} parent=11 // pred_fallthru
          _
      $region12: #{tpu_custom_call.1} parent=5 // pred_fallthru
        _
      %p201 = scmp.lt.s32.totalorder %s24, 2
      // Predicated region
      $region21: #{tpu_custom_call.1} parent=5 // pred_check
        %p202 = pneg %p201
      $region22: #{tpu_custom_call.1} parent=5 // pred_check_branch
        %204 = sbr.rel (%p202) target = $region24
      $region23: #{tpu_custom_call.1} parent=5 // pred_region
        // Predicated region
        $region25: #{tpu_custom_call.1} parent=23 // pred_check
          %p205 = pneg %p44
        $region26: #{tpu_custom_call.1} parent=23 // pred_check_branch
          %207 = sbr.rel (%p205) target = $region28
        $region27: #{tpu_custom_call.1} parent=23 // pred_region
          %s208 = sand.u32 %s34, 1
          %s209 = scalar_lea.sflag [#allocation3], %s208
          %s210 = sand.u32 %s34, 1
          %s211 = smul.addr %s210, 8
          %s212 = scalar_lea.vmem [#allocation2], %s211
          %s214 = ssub.s32 128, 128
          %215 = vsyncadd %s209, %s214
          %s216 = smul.addr %s24, 128
          %s217 = scalar_lea.hbm %s0, %s216
          %s219 = sshll.u32 %s212, 4
          %s220 = int_to_ptr.vmem [resolvable:$true] %s219
          %222 = dma.hbm_to_vmem [thread:$0]  %s217, 128, %s220, %s209
        $region28: #{tpu_custom_call.1} parent=23 // pred_fallthru
          _
        // Predicated region
        $region29: #{tpu_custom_call.1} parent=23 // pred_check
          %p223 = pneg %p70
        $region30: #{tpu_custom_call.1} parent=23 // pred_check_branch
          %225 = sbr.rel (%p223) target = $region32
        $region31: #{tpu_custom_call.1} parent=23 // pred_region
          %s226 = sand.u32 %s24, 1
          %s227 = scalar_lea.sflag [#allocation6], %s226
          %s228 = sand.u32 %s60, 1
          %s229 = scalar_lea.vmem [#allocation5], %s228
          %s231 = ssub.s32 16, 16
          %232 = vsyncadd %s227, %s231
          %s233 = smul.addr %s24, 16
          %s234 = scalar_lea.hbm %s1, %s233
          %s236 = sshll.u32 %s229, 4
          %s237 = int_to_ptr.vmem [resolvable:$true] %s236
          %239 = dma.hbm_to_vmem [thread:$0]  %s234, 16, %s237, %s227
        $region32: #{tpu_custom_call.1} parent=23 // pred_fallthru
          _
      $region24: #{tpu_custom_call.1} parent=5 // pred_fallthru
        _
      %p240 = scmp.le.s32.totalorder 1, %s24
      %p241 = scmp.lt.s32.totalorder %s24, 3
      %p242 = pnand %p240, %p241
      %p243 = pneg %p242
      // Predicated region
      $region33: #{tpu_custom_call.1} parent=5 // pred_check
        _
      $region34: #{tpu_custom_call.1} parent=5 // pred_check_branch
        %245 = sbr.rel (%p242) target = $region36
      $region35: #{tpu_custom_call.1} parent=5 // pred_region
        %s246 = ssub.s32 %s24, 1
        %s247 = sand.u32 %s37, 1
        %s248 = scalar_lea.sflag [#allocation3], %s247
        %s249 = sand.u32 %s37, 1
        %s250 = smul.addr %s249, 8
        %s251 = scalar_lea.vmem [#allocation2], %s250
        // Predicated region
        $region37: #{tpu_custom_call.1} parent=35 // pred_check
          %p252 = pneg %p50
        $region38: #{tpu_custom_call.1} parent=35 // pred_check_branch
          %254 = sbr.rel (%p252) target = $region40
        $region39: #{tpu_custom_call.1} parent=35 // pred_region
          %255 = dma.done %s248, 128
        $region40: #{tpu_custom_call.1} parent=35 // pred_fallthru
          _
        %s256 = sand.u32 %s29, 1
        %s257 = scalar_lea.sflag [#allocation6], %s256
        %s258 = sand.u32 %s63, 1
        %s259 = scalar_lea.vmem [#allocation5], %s258
        // Predicated region
        $region41: #{tpu_custom_call.1} parent=35 // pred_check
          %p260 = pneg %p76
        $region42: #{tpu_custom_call.1} parent=35 // pred_check_branch
          %262 = sbr.rel (%p260) target = $region44
        $region43: #{tpu_custom_call.1} parent=35 // pred_region
          %263 = dma.done %s257, 16
        $region44: #{tpu_custom_call.1} parent=35 // pred_fallthru
          _
        // Predicated region
        $region45: #{tpu_custom_call.1} parent=35 // pred_check
          %p264 = pneg %p97
        $region46: #{tpu_custom_call.1} parent=35 // pred_check_branch
          %266 = sbr.rel (%p264) target = $region48
        $region47: #{tpu_custom_call.1} parent=35 // pred_region
          %267 = dma.done [#allocation6], 512
        $region48: #{tpu_custom_call.1} parent=35 // pred_fallthru
          _
        %s268 = sand.u32 %s37, 1
        %s269 = scalar_lea.sflag [#allocation3], %s268
        %s270 = sand.u32 %s37, 1
        %s271 = smul.addr %s270, 8
        %s272 = scalar_lea.vmem [#allocation2], %s271
        %p273 = pneg %p50
        %p274 = pneg %p47
        %s275 = sand.u32 %s29, 1
        %s276 = scalar_lea.sflag [#allocation6], %s275
        %s277 = sand.u32 %s63, 1
        %s278 = scalar_lea.vmem [#allocation5], %s277
        %p279 = pneg %p76
        %p280 = pneg %p73
        %p281 = pneg %p97
        %p282 = pneg %p94
        %p283 = pneg %p118
        %p284 = pneg %p115
        %p285 = pneg %p144
        %p286 = pneg %p141
        %s287 = sand.u32 %s131, 1
        %s288 = scalar_lea.sflag [#allocation4], %s287
        %s289 = sand.u32 %s131, 1
        %s290 = smul.addr %s289, 8
        %s291 = scalar_lea.vmem [#allocation8], %s290
        %p292 = pneg %p170
        %p293 = pneg %p167
        %s294 = sand.u32 %s157, 1
        %s295 = scalar_lea.sflag [#allocation10], %s294
        %s296 = sand.u32 %s157, 1
        %s297 = scalar_lea.vmem [#allocation9], %s296
        %v298 = vld [vmem:[%s251] sm:$0xff]
        %v299 = vld [vmem:[%s3] sm:$0x3]
        %v300 = vld [vmem:[#allocation7] sm:$0xff]
        %v301 = vld [vmem:[#allocation7 + $0x8] sm:$0xff]
        %v302 = vld [vmem:[#allocation7 + $0x10] sm:$0xff]
        %v303 = vld [vmem:[#allocation7 + $0x18] sm:$0xff]
        %v304 = vlaneseq
        %v305 = vshrl.u32 %v304, 7
        %v306 = vsub.s32 0, %v305
        %v307 = vrot.slane %v299, %v306
        %vm308 = vcmask 261120
        %v310 = vsel %vm308, %v298, 0
        %312 = vmatprep.subr.mxu0 0.0
        %313 = vmatpush1.msra.mxu0 0.0
        %314 = vmatprep.subr.mxu0 0.0
        %315 = vmatpush1.msra.mxu0 0.0
        %316 = vmatprep.subr.mxu0 0.0
        %317 = vmatpush1.msra.mxu0 0.0
        %318 = vmatprep.subr.mxu0 0.0
        %319 = vmatpush1.msra.mxu0 0.0
        %320 = vmatprep.subr.mxu0 0.0
        %321 = vmatpush1.msra.mxu0 0.0
        %322 = vmatprep.subr.mxu0 0.0
        %323 = vmatpush1.msra.mxu0 0.0
        %324 = vmatprep.subr.mxu0 0.0
        %325 = vmatpush1.msra.mxu0 0.0
        %326 = vmatprep.subr.mxu0 0.0
        %327 = vmatpush1.msra.mxu0 0.0
        %328 = vmatprep.subr.mxu0 0.0
        %329 = vmatpush1.msra.mxu0 0.0
        %330 = vmatprep.subr.mxu0 0.0
        %331 = vmatpush1.msra.mxu0 0.0
        %332 = vmatprep.subr.mxu0 0.0
        %333 = vmatpush1.msra.mxu0 0.0
        %334 = vmatprep.subr.mxu0 0.0
        %335 = vmatpush1.msra.mxu0 0.0
        %336 = vmatprep.subr.mxu0 0.0
        %337 = vmatpush1.msra.mxu0 %v303
        %338 = vmatprep.subr.mxu0 0.0
        %339 = vmatpush1.msra.mxu0 %v302
        %340 = vmatprep.subr.mxu0 0.0
        %341 = vmatpush1.msra.mxu0 %v301
        %342 = vmatprep.subr.mxu0 0.0
        %343 = vmatpush1.msra.mxu0 %v300
        %344 = vmatprep.subr.mxu0 0.0
        %345 = vmatpush2.msra.mxu0 0.0
        %346 = vmatprep.subr.mxu0 0.0
        %347 = vmatpush2.msra.mxu0 0.0
        %348 = vmatprep.subr.mxu0 0.0
        %349 = vmatpush2.msra.mxu0 0.0
        %350 = vmatprep.subr.mxu0 0.0
        %351 = vmatpush2.msra.mxu0 0.0
        %352 = vmatprep.subr.mxu0 0.0
        %353 = vmatpush2.msra.mxu0 0.0
        %354 = vmatprep.subr.mxu0 0.0
        %355 = vmatpush2.msra.mxu0 0.0
        %356 = vmatprep.subr.mxu0 0.0
        %357 = vmatpush2.msra.mxu0 0.0
        %358 = vmatprep.subr.mxu0 0.0
        %359 = vmatpush2.msra.mxu0 0.0
        %360 = vmatprep.subr.mxu0 0.0
        %361 = vmatpush2.msra.mxu0 0.0
        %362 = vmatprep.subr.mxu0 0.0
        %363 = vmatpush2.msra.mxu0 0.0
        %364 = vmatprep.subr.mxu0 0.0
        %365 = vmatpush2.msra.mxu0 0.0
        %366 = vmatprep.subr.mxu0 0.0
        %367 = vmatpush2.msra.mxu0 0.0
        %368 = vmatprep.subr.mxu0 0.0
        %369 = vmatpush2.msra.mxu0 0.0
        %370 = vmatprep.subr.mxu0 0.0
        %371 = vmatpush2.msra.mxu0 0.0
        %372 = vmatprep.subr.mxu0 0.0
        %373 = vmatpush2.msra.mxu0 0.0
        %374 = vmatprep.subr.mxu0 0.0
        %375 = vmatpush2.msra.mxu0 0.0
        %376 = vmatprep.mubr.f32.mxu0 0.0
        %377 = vmatmul.mubr.f32.gmra.mxu0 %v310
        %v378 = vpop.f32.mrf.mxu0
        %v379 = vadd.f32 %v307, %v378
        %v380 = vpop.f32.mrf.mxu0
        %381 = vdwg.mxu0
        %v382 = vtanh.pop %v379
        %v383 = vlaneseq
        %v384 = vshrl.u32 %v383, 7
        %v385 = vsub.s32 1, %v384
        %v386 = vrot.slane %v299, %v385
        %v387 = vmul.f32 %v382, %v386
        %v388 = vsel %vm308, %v387, 0.0
        %389 = vadd.xlane.f32.xlu0 %v388
        %v390 = vpop.xlane.xlu0 %389
        %391 = vxpose.xlu0.b32.start [1/16] %v390, 128
        %392 = vxpose.xlu0.b32.cont [2/16] 0.0, 128
        %393 = vxpose.xlu0.b32.cont [3/16] 0.0, 128
        %394 = vxpose.xlu0.b32.cont [4/16] 0.0, 128
        %395 = vxpose.xlu0.b32.cont [5/16] 0.0, 128
        %396 = vxpose.xlu0.b32.cont [6/16] 0.0, 128
        %397 = vxpose.xlu0.b32.cont [7/16] 0.0, 128
        %398 = vxpose.xlu0.b32.cont [8/16] 0.0, 128
        %399 = vxpose.xlu0.b32.cont [9/16] 0.0, 128
        %400 = vxpose.xlu0.b32.cont [10/16] 0.0, 128
        %401 = vxpose.xlu0.b32.cont [11/16] 0.0, 128
        %402 = vxpose.xlu0.b32.cont [12/16] 0.0, 128
        %403 = vxpose.xlu0.b32.cont [13/16] 0.0, 128
        %404 = vxpose.xlu0.b32.cont [14/16] 0.0, 128
        %405 = vxpose.xlu0.b32.cont [15/16] 0.0, 128
        %406 = vxpose.xlu0.b32.end [16/16] 0.0, 128
        %v407 = vpop.trf.xlu0
        %v408 = vpop.trf.xlu0
        %v409 = vpop.trf.xlu0
        %v410 = vpop.trf.xlu0
        %v411 = vpop.trf.xlu0
        %v412 = vpop.trf.xlu0
        %v413 = vpop.trf.xlu0
        %v414 = vpop.trf.xlu0
        %v415 = vpop.trf.xlu0
        %v416 = vpop.trf.xlu0
        %v417 = vpop.trf.xlu0
        %v418 = vpop.trf.xlu0
        %v419 = vpop.trf.xlu0
        %v420 = vpop.trf.xlu0
        %v421 = vpop.trf.xlu0
        %v422 = vpop.trf.xlu0
        %v423 = vld [vmem:[%s259] sm:$0x1]
        %vm424 = vcmp.gt.f32.partialorder %v423, 0.0
        %v425 = vsel %vm424, %v407, -1e+30
        %vm426 = vcmask 57344
        %v427 = vsel %vm426, %v425, -inf
        %428 = vmax.xlane.f32.xlu0 %v427
        %v429 = vpop.xlane.xlu0 %428
        %v430 = vsub.f32 %v425, %v429
        %v431 = vmul.f32 %v430, 1.442695
        %v432 = vpow.pop %v431
        %v433 = vmul.f32 %v432, %v423
        %v434 = vsel %vm426, %v433, 0.0
        %435 = vadd.xlane.f32.xlu0 %v434
        %v436 = vpop.xlane.xlu0 %435
        %v437 = vrcp.pop %v436
        %v438 = vmul.f32 %v433, %v437
        %439 = vst.msk [vmem:[%s297] sm:$0x1] %vm426, %v438
        %440 = vxpose.xlu0.b32.start [1/16] %v438, 128
        %441 = vxpose.xlu0.b32.cont [2/16] 0.0, 128
        %442 = vxpose.xlu0.b32.cont [3/16] 0.0, 128
        %443 = vxpose.xlu0.b32.cont [4/16] 0.0, 128
        %444 = vxpose.xlu0.b32.cont [5/16] 0.0, 128
        %445 = vxpose.xlu0.b32.cont [6/16] 0.0, 128
        %446 = vxpose.xlu0.b32.cont [7/16] 0.0, 128
        %447 = vxpose.xlu0.b32.cont [8/16] 0.0, 128
        %448 = vxpose.xlu0.b32.cont [9/16] 0.0, 128
        %449 = vxpose.xlu0.b32.cont [10/16] 0.0, 128
        %450 = vxpose.xlu0.b32.cont [11/16] 0.0, 128
        %451 = vxpose.xlu0.b32.cont [12/16] 0.0, 128
        %452 = vxpose.xlu0.b32.cont [13/16] 0.0, 128
        %453 = vxpose.xlu0.b32.cont [14/16] 0.0, 128
        %454 = vxpose.xlu0.b32.cont [15/16] 0.0, 128
        %455 = vxpose.xlu0.b32.end [16/16] 0.0, 128
        %v456 = vpop.trf.xlu0
        %v457 = vpop.trf.xlu0
        %v458 = vpop.trf.xlu0
        %v459 = vpop.trf.xlu0
        %v460 = vpop.trf.xlu0
        %v461 = vpop.trf.xlu0
        %v462 = vpop.trf.xlu0
        %v463 = vpop.trf.xlu0
        %v464 = vpop.trf.xlu0
        %v465 = vpop.trf.xlu0
        %v466 = vpop.trf.xlu0
        %v467 = vpop.trf.xlu0
        %v468 = vpop.trf.xlu0
        %v469 = vpop.trf.xlu0
        %v470 = vpop.trf.xlu0
        %v471 = vpop.trf.xlu0
        %473 = vset.pattern.permute.xlu0 0
        %474 = vperm.xlu0 %473, %v456
        %v475 = vpop.permute.xlu0 %474
        %v477 = vmul.f32 %v298, %v475
        %478 = vst.msk [vmem:[%s291] sm:$0xff] %vm308, %v477
        %s479 = sand.u32 %s131, 1
        %s480 = scalar_lea.sflag [#allocation4], %s479
        %s481 = sand.u32 %s131, 1
        %s482 = smul.addr %s481, 8
        %s483 = scalar_lea.vmem [#allocation8], %s482
        %s484 = sand.u32 %s157, 1
        %s485 = scalar_lea.sflag [#allocation10], %s484
        %s486 = sand.u32 %s157, 1
        %s487 = scalar_lea.vmem [#allocation9], %s486
        // Predicated region
        $region49: #{tpu_custom_call.1} parent=35 // pred_check
          %p488 = pneg %p141
        $region50: #{tpu_custom_call.1} parent=35 // pred_check_branch
          %490 = sbr.rel (%p488) target = $region52
        $region51: #{tpu_custom_call.1} parent=35 // pred_region
          %s492 = ssub.s32 128, 128
          %493 = vsyncadd %s480, %s492
          %s494 = smul.addr %s29, 128
          %s495 = scalar_lea.hbm %s4, %s494
          %s497 = sshll.u32 %s483, 4
          %s498 = int_to_ptr.vmem [resolvable:$true] %s497
          %500 = dma.vmem_to_hbm [thread:$0]  %s498, 128, %s495, %s480
        $region52: #{tpu_custom_call.1} parent=35 // pred_fallthru
          _
        // Predicated region
        $region53: #{tpu_custom_call.1} parent=35 // pred_check
          %p501 = pneg %p167
        $region54: #{tpu_custom_call.1} parent=35 // pred_check_branch
          %503 = sbr.rel (%p501) target = $region56
        $region55: #{tpu_custom_call.1} parent=35 // pred_region
          %s505 = ssub.s32 16, 16
          %506 = vsyncadd %s485, %s505
          %s507 = smul.addr %s29, 16
          %s508 = scalar_lea.hbm %s5, %s507
          %s510 = sshll.u32 %s487, 4
          %s511 = int_to_ptr.vmem [resolvable:$true] %s510
          %513 = dma.vmem_to_hbm [thread:$0]  %s511, 16, %s508, %s485
        $region56: #{tpu_custom_call.1} parent=35 // pred_fallthru
          _
      $region36: #{tpu_custom_call.1} parent=5 // pred_fallthru
        _
      %p514 = scmp.le.s32.totalorder 2, %s24
      // Predicated region
      $region57: #{tpu_custom_call.1} parent=5 // pred_check
        %p515 = pneg %p514
      $region58: #{tpu_custom_call.1} parent=5 // pred_check_branch
        %517 = sbr.rel (%p515) target = $region60
      $region59: #{tpu_custom_call.1} parent=5 // pred_region
        %s518 = ssub.s32 %s24, 2
        // Predicated region
        $region61: #{tpu_custom_call.1} parent=59 // pred_check
          %p519 = pneg %p147
        $region62: #{tpu_custom_call.1} parent=59 // pred_check_branch
          %521 = sbr.rel (%p519) target = $region64
        $region63: #{tpu_custom_call.1} parent=59 // pred_region
          %s522 = sand.u32 %s132, 1
          %s523 = scalar_lea.sflag [#allocation4], %s522
          %s524 = sand.u32 %s132, 1
          %s525 = smul.addr %s524, 8
          %s526 = scalar_lea.vmem [#allocation8], %s525
          %527 = dma.done %s523, 128
        $region64: #{tpu_custom_call.1} parent=59 // pred_fallthru
          _
        // Predicated region
        $region65: #{tpu_custom_call.1} parent=59 // pred_check
          %p528 = pneg %p173
        $region66: #{tpu_custom_call.1} parent=59 // pred_check_branch
          %530 = sbr.rel (%p528) target = $region68
        $region67: #{tpu_custom_call.1} parent=59 // pred_region
          %s531 = sand.u32 %s158, 1
          %s532 = scalar_lea.sflag [#allocation10], %s531
          %s533 = sand.u32 %s158, 1
          %s534 = scalar_lea.vmem [#allocation9], %s533
          %535 = dma.done %s532, 16
        $region68: #{tpu_custom_call.1} parent=59 // pred_fallthru
          _
      $region60: #{tpu_custom_call.1} parent=5 // pred_fallthru
        _
    $region6: #{tpu_custom_call.1} parent=1 // loop_footer
      %s28 = sadd.s32 1, %s24
    $region7: #{tpu_custom_call.1} parent=1 // loop_footer_branch
      %23 = sbr.rel target = $region3
    $region8: #{tpu_custom_call.1} parent=1 // loop_exit
      _
    %536 = vsyncpa [#allocation3], 1
    %s537 = scalar_lea.sflag [#allocation3], 1
    %538 = vsyncpa %s537, 1
    %539 = vsyncpa [#allocation6], 1
    %s540 = scalar_lea.sflag [#allocation6], 1
    %541 = vsyncpa %s540, 1
    %542 = vsyncpa [#allocation4], 1
    %s543 = scalar_lea.sflag [#allocation4], 1
    %544 = vsyncpa %s543, 1
    %545 = vsyncpa [#allocation10], 1
    %s546 = scalar_lea.sflag [#allocation10], 1
    %547 = vsyncpa %s546, 1

</llo_original>
